<compile_context>
chip_gen: v7x
topology: tpu7x:2x2x1
jax: 0.10.0
libtpu: 0.0.40
codegen_flags: <defaults>
</compile_context>

<pallas_src>
import jax
import jax.numpy as jnp
from jax.experimental import pallas as pl
from jax.experimental.pallas import tpu as pltpu


def _linear_kernel(x_ref, w_ref, b_ref, o_ref, acc_ref):
    # x_ref: (TB, TF) VMEM, w_ref: (1, TF) VMEM, b_ref: (1, 1) SMEM,
    # o_ref: (TB, 1) VMEM, acc_ref: (TB, 1) f32 VMEM scratch.
    k = pl.program_id(1)

    @pl.when(k == 0)
    def _init():
        acc_ref[...] = jnp.zeros_like(acc_ref)

    # Partial dot product: VPU elementwise multiply + XLU lane reduce.
    x = x_ref[...].astype(jnp.float32)
    w = w_ref[...].astype(jnp.float32)          # broadcasts (1, TF) -> (TB, TF)
    acc_ref[...] += jnp.sum(x * w, axis=-1, keepdims=True)

    @pl.when(k == pl.num_programs(1) - 1)
    def _finalize():
        o_ref[...] = (acc_ref[...] + b_ref[0, 0]).astype(o_ref.dtype)


def _pick_tile(dim, base, max_tile):
    """Largest multiple of `base` that divides `dim` and is <= max_tile;
    falls back to the full dim (full-extent blocks are always legal)."""
    if dim % base != 0:
        return dim
    t = min(max_tile, (dim // base) * base)
    t = (t // base) * base
    while t >= base:
        if dim % t == 0:
            return t
        t -= base
    return dim


def classifier3d_forward(x, weight, bias, *, max_tb=256, max_tf=4096):
    """Equivalent of Classifier3D.forward.

    x:      (B, ...) whose trailing dims flatten to F  (torch.flatten(x, 1))
    weight: (1, F)   -- nn.Linear(in_channels, 1).weight
    bias:   (1,)     -- nn.Linear(in_channels, 1).bias
    returns (B, 1)
    """
    B = x.shape[0]
    x_flat = x.reshape(B, -1)
    F = x_flat.shape[1]
    assert weight.shape == (1, F)
    b2 = bias.reshape(1, 1).astype(jnp.float32)

    TB = _pick_tile(B, 8, max_tb)        # multiple of 8 (f32 sublanes) or == B
    TF = _pick_tile(F, 128, max_tf)      # multiple of 128 lanes or == F
    grid = (B // TB, F // TF)            # reduction (F) axis last

    itemsize = jnp.dtype(x_flat.dtype).itemsize
    cost = pl.CostEstimate(
        flops=2 * B * F,
        transcendentals=0,
        bytes_accessed=itemsize * (B * F + F) + itemsize * B,
    )

    return pl.pallas_call(
        _linear_kernel,
        out_shape=jax.ShapeDtypeStruct((B, 1), x_flat.dtype),
        grid=grid,
        in_specs=[
            pl.BlockSpec((TB, TF), lambda i, k: (i, k)),               # x tile
            pl.BlockSpec((1, TF), lambda i, k: (0, k)),                # weight tile
            pl.BlockSpec(memory_space=pltpu.MemorySpace.SMEM),         # bias scalar
        ],
        out_specs=pl.BlockSpec((TB, 1), lambda i, k: (i, 0)),          # resident over k
        scratch_shapes=[pltpu.VMEM((TB, 1), jnp.float32)],             # f32 accumulator
        compiler_params=pltpu.CompilerParams(
            dimension_semantics=("parallel", "arbitrary"),
        ),
        cost_estimate=cost,
    )(x_flat, weight, b2)


if __name__ == "__main__":
    key = jax.random.PRNGKey(0)
    kx, kw, kb = jax.random.split(key, 3)

    # Small shapes consistent with the module: flatten(B, C, H, W) -> (B, C*H*W)
    B, C, H, W = 2, 4, 16, 16
    in_channels = C * H * W  # 1024 = Linear in_features

    x = jax.random.normal(kx, (B, C, H, W), dtype=jnp.float32)

    # Deterministic synthetic parameters (nn.Linear default-ish uniform init).
    bound = 1.0 / (in_channels ** 0.5)
    weight = jax.random.uniform(kw, (1, in_channels), jnp.float32, -bound, bound)
    bias = jax.random.uniform(kb, (1,), jnp.float32, -bound, bound)

    # max_tf=256 so the small test exercises the multi-step (accumulate +
    # finalize) reduction path; real workloads use the larger default tiles.
    out = classifier3d_forward(x, weight, bias, max_tf=256)
    out = jax.block_until_ready(out)

    # Reference check against plain JAX (same semantics as the PyTorch module).
    ref = x.reshape(B, -1) @ weight.T + bias
    assert out.shape == (B, 1)
    assert jnp.allclose(out, ref, atol=1e-5, rtol=1e-5), (out, ref)

    print("KERNEL_OK")
</pallas_src>

<mosaic_0001>
module attributes {stable_mosaic.version = 11 : i64} {
  func.func @_linear_kernel(%arg0: i32, %arg1: i32, %arg2: memref<2x256xf32, #tpu.memory_space<vmem>>, %arg3: memref<1x256xf32, #tpu.memory_space<vmem>>, %arg4: memref<1x1xf32, #tpu.memory_space<smem>>, %arg5: memref<2x1xf32, #tpu.memory_space<vmem>>, %arg6: memref<2x1xf32, #tpu.memory_space<vmem>>) attributes {dimension_semantics = [#tpu.dimension_semantics<parallel>, #tpu.dimension_semantics<arbitrary>], iteration_bounds = array<i64: 1, 4>, scalar_prefetch = 0 : i64, scratch_operands = 1 : i64, tpu.core_type = #tpu.core_type<tc>, window_params = [{transform_indices = @transform_0, window_bounds = array<i64: 2, 256>}, {transform_indices = @transform_1, window_bounds = array<i64: 1, 256>}, {transform_indices = @transform_2, window_bounds = array<i64: 1, 1>}, {transform_indices = @transform_3, window_bounds = array<i64: 2, 1>}]} {
    %c0_i32 = arith.constant 0 : i32
    %0 = arith.cmpi eq, %arg1, %c0_i32 : i32
    %1 = arith.extui %0 : i1 to i32
    %c0_i32_0 = arith.constant 0 : i32
    %2 = arith.cmpi ne, %1, %c0_i32_0 : i32
    scf.if %2 {
      %cst_9 = arith.constant 0.000000e+00 : f32
      %15 = vector.broadcast %cst_9 : f32 to vector<2x1xf32>
      %c0_10 = arith.constant 0 : index
      %c0_11 = arith.constant 0 : index
      %16 = vector.load %arg6[%c0_10, %c0_11] : memref<2x1xf32, #tpu.memory_space<vmem>>, vector<2x1xf32>
      tpu.vector_store %arg6[%c0_10, %c0_11], %15 {strides = array<i32>} : memref<2x1xf32, #tpu.memory_space<vmem>>, vector<2x1xf32>,
    } else {
    }
    %c0 = arith.constant 0 : index
    %c0_1 = arith.constant 0 : index
    %3 = vector.load %arg2[%c0, %c0_1] : memref<2x256xf32, #tpu.memory_space<vmem>>, vector<2x256xf32>
    %c0_2 = arith.constant 0 : index
    %c0_3 = arith.constant 0 : index
    %4 = vector.load %arg3[%c0_2, %c0_3] : memref<1x256xf32, #tpu.memory_space<vmem>>, vector<1x256xf32>
    %c0_4 = arith.constant 0 : index
    %c0_5 = arith.constant 0 : index
    %5 = vector.load %arg6[%c0_4, %c0_5] : memref<2x1xf32, #tpu.memory_space<vmem>>, vector<2x1xf32>
    %6 = vector.broadcast %4 : vector<1x256xf32> to vector<2x256xf32>
    %7 = arith.mulf %3, %6 : vector<2x256xf32>
    %cst = arith.constant dense<0.000000e+00> : vector<2xf32>
    %8 = vector.multi_reduction <add>, %7, %cst [1] : vector<2x256xf32> to vector<2xf32>
    %9 = vector.shape_cast %8 : vector<2xf32> to vector<2x1xf32>
    %10 = arith.addf %5, %9 : vector<2x1xf32>
    %c0_6 = arith.constant 0 : index
    %c0_7 = arith.constant 0 : index
    %11 = vector.load %arg6[%c0_6, %c0_7] : memref<2x1xf32, #tpu.memory_space<vmem>>, vector<2x1xf32>
    tpu.vector_store %arg6[%c0_6, %c0_7], %10 {strides = array<i32>} : memref<2x1xf32, #tpu.memory_space<vmem>>, vector<2x1xf32>,
    %c3_i32 = arith.constant 3 : i32
    %12 = arith.cmpi eq, %arg1, %c3_i32 : i32
    %13 = arith.extui %12 : i1 to i32
    %c0_i32_8 = arith.constant 0 : i32
    %14 = arith.cmpi ne, %13, %c0_i32_8 : i32
    scf.if %14 {
      %c0_9 = arith.constant 0 : index
      %c0_10 = arith.constant 0 : index
      %15 = vector.load %arg6[%c0_9, %c0_10] : memref<2x1xf32, #tpu.memory_space<vmem>>, vector<2x1xf32>
      %c0_11 = arith.constant 0 : index
      %c0_12 = arith.constant 0 : index
      %16 = memref.load %arg4[%c0_11, %c0_12] : memref<1x1xf32, #tpu.memory_space<smem>>
      %17 = vector.broadcast %16 : f32 to vector<2x1xf32>
      %18 = arith.addf %15, %17 : vector<2x1xf32>
      %c0_13 = arith.constant 0 : index
      %c0_14 = arith.constant 0 : index
      %19 = vector.load %arg5[%c0_13, %c0_14] : memref<2x1xf32, #tpu.memory_space<vmem>>, vector<2x1xf32>
      tpu.vector_store %arg5[%c0_13, %c0_14], %18 {strides = array<i32>} : memref<2x1xf32, #tpu.memory_space<vmem>>, vector<2x1xf32>,
    } else {
    }
    return
  }
  func.func @transform_0(%arg0: i32, %arg1: i32) -> (i32, i32) {
    %c0_i32 = arith.constant 0 : i32
    return %arg0, %arg1 : i32, i32
  }
  func.func @transform_1(%arg0: i32, %arg1: i32) -> (i32, i32) {
    %c0_i32 = arith.constant 0 : i32
    %c0_i32_0 = arith.constant 0 : i32
    return %c0_i32, %arg1 : i32, i32
  }
  func.func @transform_2(%arg0: i32, %arg1: i32) -> (i32, i32) {
    %c0_i32 = arith.constant 0 : i32
    %c0_i32_0 = arith.constant 0 : i32
    %c0_i32_1 = arith.constant 0 : i32
    return %c0_i32, %c0_i32_0 : i32, i32
  }
  func.func @transform_3(%arg0: i32, %arg1: i32) -> (i32, i32) {
    %c0_i32 = arith.constant 0 : i32
    %c0_i32_0 = arith.constant 0 : i32
    return %arg0, %c0_i32 : i32, i32
  }
}

</mosaic_0001>

<llo_original>
// kernel: tpu_custom_call.1
$region0: #{tpu_custom_call.1}
  #allocation0 [shape = 'u32[]', space=smem, size = 0x4, offset = 0x4, fixed_abs, tag = 'smem constant byte address 0x4 - core index']
  #allocation1 [shape = 'u32[144,128]{1,0:T(1,128)}', space=vmem, size = 0x12000, scoped, tag = 'internal scratch']
  #allocation2 [shape = 'f32[2,1]{1,0:T(2,128)}', space=vmem, size = 0x400, scoped, tag = 'scratch operand']
  #allocation3 [shape = 'f32[1,1]{1,0:T(1,128)S(6)}', space=smem, size = 0x200, scoped, tag = 'scoped memory for tpu_custom_call.1']
  %s0 = inlined_call_operand.hbm [shape: f32[2,1024], index: 0, kind: input, shape index: {}]
  %s1 = inlined_call_operand.hbm [shape: f32[1,1024], index: 1, kind: input, shape index: {}]
  %s2 = inlined_call_operand.<no memory space> [shape: f32[1,1], index: 2, kind: input, shape index: {}]
  %s3 = inlined_call_operand.vmem [shape: f32[2,1], index: 3, kind: output, shape index: {}]
  %s4 = sld [smem:[#allocation0]]
  $region61: #{tpu_custom_call.1} parent=0
    _
  %s6 = ssub.s32 1, %s4
  %s7 = scalar_select 0, %s6, %s4
  %8 = sst [smem:[#allocation3]] %s2
  $region1: #{tpu_custom_call.1} parent=0
    #allocation4 [shape = 'u8[4096]{0}', space=vmem, size = 0x1000, scoped, tag = 'input window, operand 0']
    #allocation5 [shape = 's32[2]{0}', space=sflag, size = 0x8, scoped, tag = 'scoped memory for tpu_custom_call.1']
    #allocation6 [shape = 'u8[2048]{0}', space=vmem, size = 0x800, scoped, tag = 'input window, operand 1']
    #allocation7 [shape = 's32[2]{0}', space=sflag, size = 0x8, scoped, tag = 'scoped memory for tpu_custom_call.1']
    %9 = vsyncpa [#allocation5], 0
    %s10 = scalar_lea.sflag [#allocation5], 1
    %11 = vsyncpa %s10, 0
    %12 = vsyncpa [#allocation7], 0
    %s13 = scalar_lea.sflag [#allocation7], 1
    %14 = vsyncpa %s13, 0
    loop: start=0, step=1, limit=6
    $region2: #{tpu_custom_call.1} parent=1 // loop_pre_header
      _
    $region3: #{tpu_custom_call.1} parent=1 // loop_header
      %s16 = sphi 0, %s20
      %p17 = scmp.ge.s32.totalorder %s16, 6
      %s23 = sphi 0, %s35
      %s24 = sphi 0, %s31
      %s25 = sphi 0, %s23
      %s26 = sphi 0, %s24
      %s27 = sphi 0, %s25
      %s28 = sphi 0, %s26
      %s40 = sphi 0, %s42
      %s43 = sphi 0, %s40
      %s44 = sphi 0, %s43
      %s60 = sphi 0, %s44
      %s66 = sphi 0, %s68
      %s69 = sphi 0, %s66
      %s70 = sphi 0, %s69
      %s86 = sphi 0, %s70
      %s90 = sphi 0, %s90
      %s92 = sphi 0, %s90
      %s93 = sphi 0, %s92
      %s107 = sphi 0, %s93
      %s113 = sphi 0, %s115
      %s116 = sphi 0, %s113
      %s117 = sphi 0, %s116
      %s133 = sphi 0, %s117
    $region4: #{tpu_custom_call.1} parent=1 // loop_header_branch
      %19 = sbr.rel (%p17) target = $region8
    $region5: #{tpu_custom_call.1} parent=1 // loop_body
      %s21 = ssub.s32 %s16, 1
      %s22 = ssub.s32 %s16, 2
      %s29 = sadd.s32 1, %s24
      %p30 = scmp.ge.s32.totalorder %s29, 4
      %s31 = scalar_select %p30, 0, %s29
      %s32 = sadd.s32 1, %s23
      %s33 = scalar_select %p30, %s32, %s23
      %p34 = scmp.ge.s32.totalorder %s33, 1
      %s35 = scalar_select %p34, 0, %s33
      %s36 = ssub.s32 %s23, %s35
      %s37 = ssub.s32 %s24, %s31
      %s38 = sor.u32 %s36, %s37
      %p39 = scmp.eq.s32.totalorder %s38, 0
      %s41 = sadd.s32 %s40, 1
      %s42 = scalar_select %p39, %s40, %s41
      %p45 = pneg %p39
      %p46 = scmp.eq.s32.totalorder %s16, 3
      %p47 = por %p45, %p46
      %p48 = scmp.ne.s32.totalorder %s40, %s43
      %p49 = scmp.eq.s32.totalorder %s16, 0
      %p50 = por %p48, %p49
      %p51 = scmp.ne.s32.totalorder %s40, %s43
      %p52 = scmp.eq.s32.totalorder %s21, 3
      %p53 = por %p51, %p52
      %p54 = scmp.ne.s32.totalorder %s43, %s44
      %p55 = scmp.eq.s32.totalorder %s21, 0
      %p56 = por %p54, %p55
      %p57 = scmp.ne.s32.totalorder %s43, %s44
      %p58 = scmp.eq.s32.totalorder %s22, 3
      %p59 = por %p57, %p58
      %p61 = scmp.ne.s32.totalorder %s44, %s60
      %p62 = scmp.eq.s32.totalorder %s22, 0
      %p63 = por %p61, %p62
      %s64 = ssub.s32 %s24, %s31
      %p65 = scmp.eq.s32.totalorder %s64, 0
      %s67 = sadd.s32 %s66, 1
      %s68 = scalar_select %p65, %s66, %s67
      %p71 = pneg %p65
      %p72 = scmp.eq.s32.totalorder %s16, 3
      %p73 = por %p71, %p72
      %p74 = scmp.ne.s32.totalorder %s66, %s69
      %p75 = scmp.eq.s32.totalorder %s16, 0
      %p76 = por %p74, %p75
      %p77 = scmp.ne.s32.totalorder %s66, %s69
      %p78 = scmp.eq.s32.totalorder %s21, 3
      %p79 = por %p77, %p78
      %p80 = scmp.ne.s32.totalorder %s69, %s70
      %p81 = scmp.eq.s32.totalorder %s21, 0
      %p82 = por %p80, %p81
      %p83 = scmp.ne.s32.totalorder %s69, %s70
      %p84 = scmp.eq.s32.totalorder %s22, 3
      %p85 = por %p83, %p84
      %p87 = scmp.ne.s32.totalorder %s70, %s86
      %p88 = scmp.eq.s32.totalorder %s22, 0
      %p89 = por %p87, %p88
      %s91 = sadd.s32 %s90, 1
      %p94 = scmp.eq.s32.totalorder %s16, 3
      %p95 = scmp.ne.s32.totalorder %s90, %s92
      %p96 = scmp.eq.s32.totalorder %s16, 0
      %p97 = por %p95, %p96
      %p98 = scmp.ne.s32.totalorder %s90, %s92
      %p99 = scmp.eq.s32.totalorder %s21, 3
      %p100 = por %p98, %p99
      %p101 = scmp.ne.s32.totalorder %s92, %s93
      %p102 = scmp.eq.s32.totalorder %s21, 0
      %p103 = por %p101, %p102
      %p104 = scmp.ne.s32.totalorder %s92, %s93
      %p105 = scmp.eq.s32.totalorder %s22, 3
      %p106 = por %p104, %p105
      %p108 = scmp.ne.s32.totalorder %s93, %s107
      %p109 = scmp.eq.s32.totalorder %s22, 0
      %p110 = por %p108, %p109
      %s111 = ssub.s32 %s23, %s35
      %p112 = scmp.eq.s32.totalorder %s111, 0
      %s114 = sadd.s32 %s113, 1
      %s115 = scalar_select %p112, %s113, %s114
      %p118 = pneg %p112
      %p119 = scmp.eq.s32.totalorder %s16, 3
      %p120 = por %p118, %p119
      %p121 = scmp.ne.s32.totalorder %s113, %s116
      %p122 = scmp.eq.s32.totalorder %s16, 0
      %p123 = por %p121, %p122
      %p124 = scmp.ne.s32.totalorder %s113, %s116
      %p125 = scmp.eq.s32.totalorder %s21, 3
      %p126 = por %p124, %p125
      %p127 = scmp.ne.s32.totalorder %s116, %s117
      %p128 = scmp.eq.s32.totalorder %s21, 0
      %p129 = por %p127, %p128
      %p130 = scmp.ne.s32.totalorder %s116, %s117
      %p131 = scmp.eq.s32.totalorder %s22, 3
      %p132 = por %p130, %p131
      %p134 = scmp.ne.s32.totalorder %s117, %s133
      %p135 = scmp.eq.s32.totalorder %s22, 0
      %p136 = por %p134, %p135
      %p137 = scmp.le.s32.totalorder 1, %s16
      %p138 = scmp.lt.s32.totalorder %s16, 5
      %p139 = pnand %p137, %p138
      %p140 = pneg %p139
      // Predicated region
      $region9: #{tpu_custom_call.1} parent=5 // pred_check
        _
      $region10: #{tpu_custom_call.1} parent=5 // pred_check_branch
        %142 = sbr.rel (%p139) target = $region12
      $region11: #{tpu_custom_call.1} parent=5 // pred_region
        %s143 = ssub.s32 %s16, 1
        // Predicated region
        $region13: #{tpu_custom_call.1} parent=11 // pred_check
          %p144 = pneg %p103
        $region14: #{tpu_custom_call.1} parent=11 // pred_check_branch
          %146 = sbr.rel (%p144) target = $region16
        $region15: #{tpu_custom_call.1} parent=11 // pred_region
          _
        $region16: #{tpu_custom_call.1} parent=11 // pred_fallthru
          _
      $region12: #{tpu_custom_call.1} parent=5 // pred_fallthru
        _
      %p147 = scmp.lt.s32.totalorder %s16, 4
      // Predicated region
      $region17: #{tpu_custom_call.1} parent=5 // pred_check
        %p148 = pneg %p147
      $region18: #{tpu_custom_call.1} parent=5 // pred_check_branch
        %150 = sbr.rel (%p148) target = $region20
      $region19: #{tpu_custom_call.1} parent=5 // pred_region
        // Predicated region
        $region21: #{tpu_custom_call.1} parent=19 // pred_check
          %p151 = pneg %p50
        $region22: #{tpu_custom_call.1} parent=19 // pred_check_branch
          %153 = sbr.rel (%p151) target = $region24
        $region23: #{tpu_custom_call.1} parent=19 // pred_region
          %s154 = sand.u32 %s40, 1
          %s155 = scalar_lea.sflag [#allocation5], %s154
          %s156 = sand.u32 %s40, 1
          %s157 = smul.addr %s156, 4
          %s158 = scalar_lea.vmem [#allocation4], %s157
          %s159 = smul.u32 2, %s24
          %s161 = ssub.s32 64, 64
          %162 = vsyncadd %s155, %s161
          %s163 = smul.addr %s23, 8
          %s164 = sadd.s32 %s159, %s163
          %s165 = smul.addr %s164, 32
          %s166 = scalar_lea.hbm %s0, %s165
          %s168 = sshll.u32 %s158, 4
          %s169 = int_to_ptr.vmem [resolvable:$true] %s168
          %171 = dma.hbm_to_vmem [thread:$0]  %s166, 64, %s169, %s155
        $region24: #{tpu_custom_call.1} parent=19 // pred_fallthru
          _
        // Predicated region
        $region25: #{tpu_custom_call.1} parent=19 // pred_check
          %p172 = pneg %p76
        $region26: #{tpu_custom_call.1} parent=19 // pred_check_branch
          %174 = sbr.rel (%p172) target = $region28
        $region27: #{tpu_custom_call.1} parent=19 // pred_region
          %s175 = sand.u32 %s66, 1
          %s176 = scalar_lea.sflag [#allocation7], %s175
          %s177 = sand.u32 %s66, 1
          %s178 = smul.addr %s177, 2
          %s179 = scalar_lea.vmem [#allocation6], %s178
          %s180 = smul.u32 2, %s24
          %s182 = ssub.s32 32, 32
          %183 = vsyncadd %s176, %s182
          %s184 = smul.addr %s180, 16
          %s185 = scalar_lea.hbm %s1, %s184
          %s187 = sshll.u32 %s179, 4
          %s188 = int_to_ptr.vmem [resolvable:$true] %s187
          %190 = dma.hbm_to_vmem [thread:$0]  %s185, 32, %s188, %s176
        $region28: #{tpu_custom_call.1} parent=19 // pred_fallthru
          _
      $region20: #{tpu_custom_call.1} parent=5 // pred_fallthru
        _
      %p191 = scmp.le.s32.totalorder 1, %s16
      %p192 = scmp.lt.s32.totalorder %s16, 5
      %p193 = pnand %p191, %p192
      %p194 = pneg %p193
      // Predicated region
      $region29: #{tpu_custom_call.1} parent=5 // pred_check
        _
      $region30: #{tpu_custom_call.1} parent=5 // pred_check_branch
        %196 = sbr.rel (%p193) target = $region32
      $region31: #{tpu_custom_call.1} parent=5 // pred_region
        %s197 = ssub.s32 %s16, 1
        %s198 = sand.u32 %s43, 1
        %s199 = scalar_lea.sflag [#allocation5], %s198
        %s200 = sand.u32 %s43, 1
        %s201 = smul.addr %s200, 4
        %s202 = scalar_lea.vmem [#allocation4], %s201
        // Predicated region
        $region33: #{tpu_custom_call.1} parent=31 // pred_check
          %p203 = pneg %p56
        $region34: #{tpu_custom_call.1} parent=31 // pred_check_branch
          %205 = sbr.rel (%p203) target = $region36
        $region35: #{tpu_custom_call.1} parent=31 // pred_region
          %206 = dma.done %s199, 64
        $region36: #{tpu_custom_call.1} parent=31 // pred_fallthru
          _
        %s207 = sand.u32 %s69, 1
        %s208 = scalar_lea.sflag [#allocation7], %s207
        %s209 = sand.u32 %s69, 1
        %s210 = smul.addr %s209, 2
        %s211 = scalar_lea.vmem [#allocation6], %s210
        // Predicated region
        $region37: #{tpu_custom_call.1} parent=31 // pred_check
          %p212 = pneg %p82
        $region38: #{tpu_custom_call.1} parent=31 // pred_check_branch
          %214 = sbr.rel (%p212) target = $region40
        $region39: #{tpu_custom_call.1} parent=31 // pred_region
          %215 = dma.done %s208, 32
        $region40: #{tpu_custom_call.1} parent=31 // pred_fallthru
          _
        %s216 = sand.u32 %s43, 1
        %s217 = scalar_lea.sflag [#allocation5], %s216
        %s218 = sand.u32 %s43, 1
        %s219 = smul.addr %s218, 4
        %s220 = scalar_lea.vmem [#allocation4], %s219
        %p221 = pneg %p56
        %p222 = pneg %p53
        %s223 = sand.u32 %s69, 1
        %s224 = scalar_lea.sflag [#allocation7], %s223
        %s225 = sand.u32 %s69, 1
        %s226 = smul.addr %s225, 2
        %s227 = scalar_lea.vmem [#allocation6], %s226
        %p228 = pneg %p82
        %p229 = pneg %p79
        %p230 = pneg %p103
        %p231 = pneg %p100
        %p232 = pneg %p129
        %p233 = pneg %p126
        %p234 = scmp.lt.s32.totalorder %s25, 0
        %s235 = scalar_select %p234, %s25, 0
        %s236 = smul.addr %s235, 2
        %s237 = scalar_lea.vmem %s3, %s236
        %s238 = smul.u32 2, %s26
        %s239 = smul.u32 2, %s26
        %p240 = scmp.lt.s32.totalorder %s25, 0
        %s241 = scalar_select %p240, %s25, 0
        %s242 = smul.addr %s241, 2
        %s243 = scalar_lea.vmem %s3, %s242
        %p244 = scmp.eq.s32.totalorder %s26, 0
        // Predicated region
        $region41: #{tpu_custom_call.1} parent=31 // pred_check
          %p245 = pneg %p244
        $region42: #{tpu_custom_call.1} parent=31 // pred_check_branch
          %247 = sbr.rel (%p245) target = $region44
        $region43: #{tpu_custom_call.1} parent=31 // pred_region
          %vm248 = vcmask 1024
          %249 = vst.msk [vmem:[#allocation2] sm:$0x3] %vm248, 0.0
        $region44: #{tpu_custom_call.1} parent=31 // pred_fallthru
          _
        %v250 = vld [vmem:[%s202] sm:$0xf]
        %v251 = vld [vmem:[%s211] sm:$0x3]
        %v252 = vld [vmem:[#allocation2] sm:$0x3]
        %v254 = vlaneseq
        %v255 = vshrl.u32 %v254, 7
        %v256 = vsub.s32 0, %v255
        %v257 = vrot.slane %v251, %v256
        %v258 = vlaneseq
        %v259 = vshrl.u32 %v258, 7
        %v260 = vsub.s32 1, %v259
        %v261 = vrot.slane %v251, %v260
        %v262 = vcombine.low %v257, %v261
        %v264 = vunpack.c.l.s4 1983009808
        %v265 = vunpack.c.0.s8 %v264
        %v266 = vlaneseq
        %v267 = vshrl.u32 %v266, 7
        %v268 = vsub.s32 %v265, %v267
        %v269 = vrot.slane %v262, %v268
        %v271 = vmul.f32 %v250, %v269
        %v274 = vunpack.c.l.s4 1983009808
        %v275 = vunpack.c.0.s8 %v274
        %v276 = vlaneseq
        %v277 = vshrl.u32 %v276, 7
        %v278 = vsub.s32 %v275, %v277
        %v279 = vrot.slane %v271, %v278
        %v280 = vcombine.high %v279, %v279
        %vm283 = vcmask 1041408
        %v284 = vsel %vm283, %v279, 0.0
        %v285 = vsel %vm283, %v280, 0.0
        %v286 = vadd.f32 %v284, %v285
        %287 = vadd.xlane.f32.xlu0 %v286
        %v288 = vpop.xlane.xlu0 %287
        %v289 = vadd.f32 %v252, %v288
        %vm290 = vcmask 1024
        %291 = vst.msk [vmem:[#allocation2] sm:$0x3] %vm290, %v289
        %p292 = scmp.eq.s32.totalorder %s26, 3
        // Predicated region
        $region45: #{tpu_custom_call.1} parent=31 // pred_check
          %p293 = pneg %p292
        $region46: #{tpu_custom_call.1} parent=31 // pred_check_branch
          %295 = sbr.rel (%p293) target = $region48
        $region47: #{tpu_custom_call.1} parent=31 // pred_region
          %v296 = vld [vmem:[#allocation2] sm:$0x3]
          %s297 = sld [smem:[#allocation3]]
          %v298 = vstv %s297
          %v299 = vadd.f32 %v296, %v298
          %300 = vst.msk [vmem:[%s243] sm:$0x3] %vm290, %v299
        $region48: #{tpu_custom_call.1} parent=31 // pred_fallthru
          _
        %p301 = scmp.lt.s32.totalorder %s25, 0
        %s302 = scalar_select %p301, %s25, 0
        %s303 = smul.addr %s302, 2
        %s304 = scalar_lea.vmem %s3, %s303
        // Predicated region
        $region49: #{tpu_custom_call.1} parent=31 // pred_check
          %p305 = pneg %p126
        $region50: #{tpu_custom_call.1} parent=31 // pred_check_branch
          %307 = sbr.rel (%p305) target = $region52
        $region51: #{tpu_custom_call.1} parent=31 // pred_region
          _
        $region52: #{tpu_custom_call.1} parent=31 // pred_fallthru
          _
        // Predicated region
        $region53: #{tpu_custom_call.1} parent=31 // pred_check
          %p308 = pneg %p126
        $region54: #{tpu_custom_call.1} parent=31 // pred_check_branch
          %310 = sbr.rel (%p308) target = $region56
        $region55: #{tpu_custom_call.1} parent=31 // pred_region
          %p311 = scmp.lt.s32.totalorder %s25, 0
          %s312 = scalar_select %p311, %s25, 0
          %s313 = smul.addr %s312, 2
          %s314 = scalar_lea.vmem %s3, %s313
        $region56: #{tpu_custom_call.1} parent=31 // pred_fallthru
          _
      $region32: #{tpu_custom_call.1} parent=5 // pred_fallthru
        _
      %p315 = scmp.le.s32.totalorder 2, %s16
      // Predicated region
      $region57: #{tpu_custom_call.1} parent=5 // pred_check
        %p316 = pneg %p315
      $region58: #{tpu_custom_call.1} parent=5 // pred_check_branch
        %318 = sbr.rel (%p316) target = $region60
      $region59: #{tpu_custom_call.1} parent=5 // pred_region
        %s319 = ssub.s32 %s16, 2
      $region60: #{tpu_custom_call.1} parent=5 // pred_fallthru
        _
    $region6: #{tpu_custom_call.1} parent=1 // loop_footer
      %s20 = sadd.s32 1, %s16
    $region7: #{tpu_custom_call.1} parent=1 // loop_footer_branch
      %15 = sbr.rel target = $region3
    $region8: #{tpu_custom_call.1} parent=1 // loop_exit
      _
    %320 = vsyncpa [#allocation5], 1
    %s321 = scalar_lea.sflag [#allocation5], 1
    %322 = vsyncpa %s321, 1
    %323 = vsyncpa [#allocation7], 1
    %s324 = scalar_lea.sflag [#allocation7], 1
    %325 = vsyncpa %s324, 1

</llo_original>
